<compile_context>
chip_gen: v7x
topology: tpu7x:2x2x1
jax: 0.10.0
libtpu: 0.0.40
codegen_flags: <defaults>
</compile_context>

<pallas_src>
import functools

import jax
import jax.numpy as jnp
from jax.experimental import pallas as pl
from jax.experimental.pallas import tpu as pltpu


_LANE = 128  # batch-tile granularity (batch lives on the lane axis)


def _round_up(n, m):
    return ((n + m - 1) // m) * m


def _vmem_budget_bytes():
    """Generation-aware VMEM budget (~48 MiB/TC on v7x, ~96 MiB on v5e/v6e)."""
    try:
        cap = int(getattr(pltpu.get_tpu_info(), "vmem_capacity_bytes",
                          64 * 1024 * 1024))
    except Exception:
        cap = 64 * 1024 * 1024                     # conservative: fits every gen
    return min((cap * 3) // 4, 100 * 1024 * 1024)


def encoder_kernel(xT_ref, cT_ref, w1x_ref, w1c_ref, b1_ref,
                   w2_ref, b2_ref, wh_ref, bh_ref, outT_ref):
    """One batch tile (batch on the lane axis) of the CVAE encoder MLP.

    For a [*, TB] activation tile:
        h    = LeakyReLU_0.2(W1x @ x^T + W1c @ c^T + b1)    # concat fused
        h    = LeakyReLU_0.2(W2 @ h + b2)
        outT = [Wm; Wv] @ h + [bm; bv]                      # heads fused
    MXU accumulates in f32; LeakyReLU runs in f32 on the VPU.
    """
    w_dtype = w1x_ref.dtype

    # Layer 1 (concat-free: split W1 into its x / condition columns).
    h = jnp.dot(w1x_ref[...], xT_ref[...], preferred_element_type=jnp.float32)
    h = h + jnp.dot(w1c_ref[...], cT_ref[...],
                    preferred_element_type=jnp.float32)
    h = h + b1_ref[...]                       # [H, 1] lane-broadcast
    h = jnp.where(h > 0, h, 0.2 * h)          # LeakyReLU(0.2)

    # Layer 2.
    h = jnp.dot(w2_ref[...], h.astype(w_dtype),
                preferred_element_type=jnp.float32) + b2_ref[...]
    h = jnp.where(h > 0, h, 0.2 * h)

    # Fused mean / log_var head: one MXU pass, one lane-dense store.
    out = jnp.dot(wh_ref[...], h.astype(w_dtype),
                  preferred_element_type=jnp.float32) + bh_ref[...]
    outT_ref[...] = out.astype(outT_ref.dtype)


def encoder_forward(x, condition, params, *, block_b=8192):
    """Batch-in-lanes, concat-free Pallas call for the full encoder hot path."""
    B, d_x = x.shape
    d_c = condition.shape[1]
    w1, w2 = params["w1"], params["w2"]              # [H, d_x+d_c], [H, H]
    wm, wv = params["wm"], params["wv"]              # [L, H]
    H = w1.shape[0]
    L = wm.shape[0]
    L2 = 2 * L
    w_dtype = w1.dtype
    w_isz = w1.dtype.itemsize
    a_isz = w_isz                                    # activations stream in w_dtype
    o_isz = 4                                        # f32 outputs

    # ---- weight plumbing (tiny tensors; heads fused) ----------------------
    w1x, w1c = w1[:, :d_x], w1[:, d_x:]
    b1, b2 = params["b1"], params["b2"]              # [H, 1] f32
    wh = jnp.concatenate([wm, wv], axis=0)           # [2L, H]
    bh = jnp.concatenate([params["bm"], params["bv"]], axis=0)   # [2L, 1] f32

    # ---- batch-tile selection against a generation-aware VMEM budget ------
    budget = _vmem_budget_bytes()

    def vmem_est(t):
        acts = 2 * t * (d_x + d_c) * a_isz           # double-buffered input tiles
        outs = 2 * t * L2 * o_isz                    # double-buffered output tile
        wts = (((d_x + d_c) * H + H * H + H * L2) * w_isz
               + (2 * H + L2) * 4)                   # single-buffered residents
        tmp = (2 * H + L2) * t * 4                   # f32 intermediates
        return acts + outs + wts + tmp

    pb0 = _round_up(B, _LANE)
    tb = min(_round_up(max(block_b, 1), _LANE), pb0)
    while tb > _LANE and vmem_est(tb) > budget:
        tb = _round_up(tb // 2, _LANE)
    # Keep >=2 grid steps when the batch allows it so the "parallel" axis can
    # shard across both TensorCores on v7x.
    if pb0 >= 2 * _LANE and pb0 // tb < 2:
        tb = _round_up(pb0 // 2, _LANE)
    pb = _round_up(B, tb)
    grid = (pb // tb,)

    # ---- stream activations batch-in-lanes, in the weight dtype ----------
    if pb != B:
        x = jnp.pad(x, ((0, pb - B), (0, 0)))
        condition = jnp.pad(condition, ((0, pb - B), (0, 0)))
    xT = x.T.astype(w_dtype)                         # [d_x, pb]
    cT = condition.T.astype(w_dtype)                 # [d_c, pb]

    flops = 2 * pb * ((d_x + d_c) * H + H * H + H * L2)
    bytes_accessed = (pb * (d_x + d_c) * a_isz + pb * L2 * o_isz
                      + ((d_x + d_c) * H + H * H + H * L2) * w_isz
                      + (2 * H + L2) * 4)

    def resident(shape):
        # Constant-index operand: fetched once, single-buffered in VMEM.
        return pl.BlockSpec(shape, lambda i: (0, 0),
                            pipeline_mode=pl.Buffered(1))

    out = pl.pallas_call(
        encoder_kernel,
        out_shape=jax.ShapeDtypeStruct((L2, pb), jnp.float32),
        grid_spec=pl.GridSpec(
            grid=grid,
            in_specs=[
                pl.BlockSpec((d_x, tb), lambda i: (0, i)),   # x^T tile
                pl.BlockSpec((d_c, tb), lambda i: (0, i)),   # condition^T tile
                resident((H, d_x)),                          # W1[:, :d_x]
                resident((H, d_c)),                          # W1[:, d_x:]
                resident((H, 1)),                            # b1
                resident((H, H)),                            # W2
                resident((H, 1)),                            # b2
                resident((L2, H)),                           # [Wm; Wv]
                resident((L2, 1)),                           # [bm; bv]
            ],
            out_specs=pl.BlockSpec((L2, tb), lambda i: (0, i)),
        ),
        compiler_params=pltpu.CompilerParams(
            dimension_semantics=("parallel",),
            vmem_limit_bytes=int(budget)),
        cost_estimate=pl.CostEstimate(
            flops=flops, transcendentals=0, bytes_accessed=bytes_accessed),
    )(xT, cT, w1x, w1c, b1, w2, b2, wh, bh)

    out = out[:, :B].T                               # [B, 2L]
    return out[:, :L], out[:, L:]


def init_params(key, input_dim, hidden_dim, latent_dim, condition_dim,
                dtype=jnp.float32):
    """Synthetic params in torch layout: W [out_features, in_features],
    b [out_features, 1].  `dtype` applies to weights (use bf16 on v6e/v7x);
    biases stay f32 and all matmuls accumulate in f32."""
    d_in = input_dim + condition_dim
    keys = jax.random.split(key, 8)
    s = 0.1
    mk = lambda k, shp: s * jax.random.normal(k, shp, jnp.float32)
    return {
        "w1": mk(keys[0], (hidden_dim, d_in)).astype(dtype),
        "b1": mk(keys[1], (hidden_dim, 1)),
        "w2": mk(keys[2], (hidden_dim, hidden_dim)).astype(dtype),
        "b2": mk(keys[3], (hidden_dim, 1)),
        "wm": mk(keys[4], (latent_dim, hidden_dim)).astype(dtype),
        "bm": mk(keys[5], (latent_dim, 1)),
        "wv": mk(keys[6], (latent_dim, hidden_dim)).astype(dtype),
        "bv": mk(keys[7], (latent_dim, 1)),
    }


def reference_forward(x, condition, params):
    """Pure-JAX f32 reference of the PyTorch forward for correctness checks."""
    f32 = jnp.float32
    xc = jnp.concatenate([x, condition], axis=1).astype(f32)
    leaky = lambda v: jnp.where(v > 0, v, 0.2 * v)
    h = leaky(xc @ params["w1"].astype(f32).T + params["b1"].T)
    h = leaky(h @ params["w2"].astype(f32).T + params["b2"].T)
    mean = h @ params["wm"].astype(f32).T + params["bm"].T
    log_var = h @ params["wv"].astype(f32).T + params["bv"].T
    return mean, log_var


if __name__ == "__main__":
    batch, input_dim, condition_dim, hidden_dim, latent_dim = 8, 16, 8, 32, 8

    key = jax.random.PRNGKey(0)
    kx, kc, kp = jax.random.split(key, 3)
    x = jax.random.normal(kx, (batch, input_dim), jnp.float32)
    condition = jax.random.normal(kc, (batch, condition_dim), jnp.float32)
    params = init_params(kp, input_dim, hidden_dim, latent_dim, condition_dim)

    fwd = jax.jit(functools.partial(encoder_forward, block_b=8192))
    mean, log_var = fwd(x, condition, params)
    jax.block_until_ready((mean, log_var))

    mean_ref, log_var_ref = reference_forward(x, condition, params)
    assert mean.shape == (batch, latent_dim) and log_var.shape == (batch, latent_dim)
    assert jnp.allclose(mean, mean_ref, atol=1e-4, rtol=1e-4)
    assert jnp.allclose(log_var, log_var_ref, atol=1e-4, rtol=1e-4)

    # Batch not a multiple of the 128-lane tile (padding path, single step).
    b2 = 70
    x2 = jax.random.normal(jax.random.PRNGKey(1), (b2, input_dim), jnp.float32)
    c2 = jax.random.normal(jax.random.PRNGKey(2), (b2, condition_dim), jnp.float32)
    m2, v2 = encoder_forward(x2, c2, params, block_b=256)
    jax.block_until_ready((m2, v2))
    m2_ref, v2_ref = reference_forward(x2, c2, params)
    assert m2.shape == (b2, latent_dim) and v2.shape == (b2, latent_dim)
    assert jnp.allclose(m2, m2_ref, atol=1e-4, rtol=1e-4)
    assert jnp.allclose(v2, v2_ref, atol=1e-4, rtol=1e-4)

    # Multi-step grid (>=2 tiles => megacore-shardable on v7x) + padding.
    b3 = 300
    x3 = jax.random.normal(jax.random.PRNGKey(3), (b3, input_dim), jnp.float32)
    c3 = jax.random.normal(jax.random.PRNGKey(4), (b3, condition_dim), jnp.float32)
    m3, v3 = encoder_forward(x3, c3, params)
    jax.block_until_ready((m3, v3))
    m3_ref, v3_ref = reference_forward(x3, c3, params)
    assert jnp.allclose(m3, m3_ref, atol=1e-4, rtol=1e-4)
    assert jnp.allclose(v3, v3_ref, atol=1e-4, rtol=1e-4)

    # bf16 weight / bf16 activation-streaming path (v6e/v7x); loose tolerance
    # since hidden activations are rounded to bf16 between layers.
    params_bf16 = init_params(kp, input_dim, hidden_dim, latent_dim,
                              condition_dim, dtype=jnp.bfloat16)
    mb, vb = encoder_forward(x, condition, params_bf16)
    jax.block_until_ready((mb, vb))
    mb_ref, vb_ref = reference_forward(x, condition, params_bf16)
    assert jnp.allclose(mb, mb_ref, atol=5e-2, rtol=5e-2)
    assert jnp.allclose(vb, vb_ref, atol=5e-2, rtol=5e-2)

    print("KERNEL_OK")
</pallas_src>

<mosaic_0001>
module attributes {stable_mosaic.version = 11 : i64} {
  func.func @encoder_kernel(%arg0: i32, %arg1: memref<16x128xf32, #tpu.memory_space<vmem>>, %arg2: memref<8x128xf32, #tpu.memory_space<vmem>>, %arg3: memref<32x16xf32, #tpu.memory_space<vmem>>, %arg4: memref<32x8xf32, #tpu.memory_space<vmem>>, %arg5: memref<32x1xf32, #tpu.memory_space<vmem>>, %arg6: memref<32x32xf32, #tpu.memory_space<vmem>>, %arg7: memref<32x1xf32, #tpu.memory_space<vmem>>, %arg8: memref<16x32xf32, #tpu.memory_space<vmem>>, %arg9: memref<16x1xf32, #tpu.memory_space<vmem>>, %arg10: memref<16x128xf32, #tpu.memory_space<vmem>>) attributes {dimension_semantics = [#tpu.dimension_semantics<parallel>], iteration_bounds = array<i64: 1>, scalar_prefetch = 0 : i64, scratch_operands = 0 : i64, tpu.core_type = #tpu.core_type<tc>, window_params = [{transform_indices = @transform_0, window_bounds = array<i64: 16, 128>}, {transform_indices = @transform_1, window_bounds = array<i64: 8, 128>}, {pipeline_mode = #tpu.pipeline_mode<synchronous>, transform_indices = @transform_2, window_bounds = array<i64: 32, 16>}, {pipeline_mode = #tpu.pipeline_mode<synchronous>, transform_indices = @transform_3, window_bounds = array<i64: 32, 8>}, {pipeline_mode = #tpu.pipeline_mode<synchronous>, transform_indices = @transform_4, window_bounds = array<i64: 32, 1>}, {pipeline_mode = #tpu.pipeline_mode<synchronous>, transform_indices = @transform_5, window_bounds = array<i64: 32, 32>}, {pipeline_mode = #tpu.pipeline_mode<synchronous>, transform_indices = @transform_6, window_bounds = array<i64: 32, 1>}, {pipeline_mode = #tpu.pipeline_mode<synchronous>, transform_indices = @transform_7, window_bounds = array<i64: 16, 32>}, {pipeline_mode = #tpu.pipeline_mode<synchronous>, transform_indices = @transform_8, window_bounds = array<i64: 16, 1>}, {transform_indices = @transform_9, window_bounds = array<i64: 16, 128>}]} {
    %c0 = arith.constant 0 : index
    %c0_0 = arith.constant 0 : index
    %0 = vector.load %arg3[%c0, %c0_0] : memref<32x16xf32, #tpu.memory_space<vmem>>, vector<32x16xf32>
    %c0_1 = arith.constant 0 : index
    %c0_2 = arith.constant 0 : index
    %1 = vector.load %arg1[%c0_1, %c0_2] : memref<16x128xf32, #tpu.memory_space<vmem>>, vector<16x128xf32>
    %cst = arith.constant dense<0.000000e+00> : vector<32x128xf32>
    %2 = tpu.matmul %0, %1, %cst {dimension_numbers = #tpu.dot_dimension_numbers<[1], [0], [0], [1], [0, 0, 1, 1], [], []>} : vector<32x16xf32>, vector<16x128xf32>, vector<32x128xf32> -> vector<32x128xf32>
    %c0_3 = arith.constant 0 : index
    %c0_4 = arith.constant 0 : index
    %3 = vector.load %arg4[%c0_3, %c0_4] : memref<32x8xf32, #tpu.memory_space<vmem>>, vector<32x8xf32>
    %c0_5 = arith.constant 0 : index
    %c0_6 = arith.constant 0 : index
    %4 = vector.load %arg2[%c0_5, %c0_6] : memref<8x128xf32, #tpu.memory_space<vmem>>, vector<8x128xf32>
    %cst_7 = arith.constant dense<0.000000e+00> : vector<32x128xf32>
    %5 = tpu.matmul %3, %4, %cst_7 {dimension_numbers = #tpu.dot_dimension_numbers<[1], [0], [0], [1], [0, 0, 1, 1], [], []>} : vector<32x8xf32>, vector<8x128xf32>, vector<32x128xf32> -> vector<32x128xf32>
    %6 = arith.addf %2, %5 : vector<32x128xf32>
    %c0_8 = arith.constant 0 : index
    %c0_9 = arith.constant 0 : index
    %7 = vector.load %arg5[%c0_8, %c0_9] : memref<32x1xf32, #tpu.memory_space<vmem>>, vector<32x1xf32>
    %8 = vector.broadcast %7 : vector<32x1xf32> to vector<32x128xf32>
    %9 = arith.addf %6, %8 : vector<32x128xf32>
    %cst_10 = arith.constant 0.000000e+00 : f32
    %10 = vector.broadcast %cst_10 : f32 to vector<32x128xf32>
    %11 = arith.cmpf ogt, %9, %10 : vector<32x128xf32>
    %cst_11 = arith.constant 2.000000e-01 : f32
    %12 = vector.broadcast %cst_11 : f32 to vector<32x128xf32>
    %13 = arith.mulf %12, %9 : vector<32x128xf32>
    %14 = arith.select %11, %9, %13 : vector<32x128xi1>, vector<32x128xf32>
    %c0_12 = arith.constant 0 : index
    %c0_13 = arith.constant 0 : index
    %15 = vector.load %arg6[%c0_12, %c0_13] : memref<32x32xf32, #tpu.memory_space<vmem>>, vector<32x32xf32>
    %cst_14 = arith.constant dense<0.000000e+00> : vector<32x128xf32>
    %16 = tpu.matmul %15, %14, %cst_14 {dimension_numbers = #tpu.dot_dimension_numbers<[1], [0], [0], [1], [0, 0, 1, 1], [], []>} : vector<32x32xf32>, vector<32x128xf32>, vector<32x128xf32> -> vector<32x128xf32>
    %c0_15 = arith.constant 0 : index
    %c0_16 = arith.constant 0 : index
    %17 = vector.load %arg7[%c0_15, %c0_16] : memref<32x1xf32, #tpu.memory_space<vmem>>, vector<32x1xf32>
    %18 = vector.broadcast %17 : vector<32x1xf32> to vector<32x128xf32>
    %19 = arith.addf %16, %18 : vector<32x128xf32>
    %cst_17 = arith.constant 0.000000e+00 : f32
    %20 = vector.broadcast %cst_17 : f32 to vector<32x128xf32>
    %21 = arith.cmpf ogt, %19, %20 : vector<32x128xf32>
    %cst_18 = arith.constant 2.000000e-01 : f32
    %22 = vector.broadcast %cst_18 : f32 to vector<32x128xf32>
    %23 = arith.mulf %22, %19 : vector<32x128xf32>
    %24 = arith.select %21, %19, %23 : vector<32x128xi1>, vector<32x128xf32>
    %c0_19 = arith.constant 0 : index
    %c0_20 = arith.constant 0 : index
    %25 = vector.load %arg8[%c0_19, %c0_20] : memref<16x32xf32, #tpu.memory_space<vmem>>, vector<16x32xf32>
    %cst_21 = arith.constant dense<0.000000e+00> : vector<16x128xf32>
    %26 = tpu.matmul %25, %24, %cst_21 {dimension_numbers = #tpu.dot_dimension_numbers<[1], [0], [0], [1], [0, 0, 1, 1], [], []>} : vector<16x32xf32>, vector<32x128xf32>, vector<16x128xf32> -> vector<16x128xf32>
    %c0_22 = arith.constant 0 : index
    %c0_23 = arith.constant 0 : index
    %27 = vector.load %arg9[%c0_22, %c0_23] : memref<16x1xf32, #tpu.memory_space<vmem>>, vector<16x1xf32>
    %28 = vector.broadcast %27 : vector<16x1xf32> to vector<16x128xf32>
    %29 = arith.addf %26, %28 : vector<16x128xf32>
    %c0_24 = arith.constant 0 : index
    %c0_25 = arith.constant 0 : index
    %30 = vector.load %arg10[%c0_24, %c0_25] : memref<16x128xf32, #tpu.memory_space<vmem>>, vector<16x128xf32>
    tpu.vector_store %arg10[%c0_24, %c0_25], %29 {strides = array<i32>} : memref<16x128xf32, #tpu.memory_space<vmem>>, vector<16x128xf32>,
    return
  }
  func.func @transform_0(%arg0: i32) -> (i32, i32) {
    %c0_i32 = arith.constant 0 : i32
    %c0_i32_0 = arith.constant 0 : i32
    return %c0_i32, %arg0 : i32, i32
  }
  func.func @transform_1(%arg0: i32) -> (i32, i32) {
    %c0_i32 = arith.constant 0 : i32
    %c0_i32_0 = arith.constant 0 : i32
    return %c0_i32, %arg0 : i32, i32
  }
  func.func @transform_2(%arg0: i32) -> (i32, i32) {
    %c0_i32 = arith.constant 0 : i32
    %c0_i32_0 = arith.constant 0 : i32
    %c0_i32_1 = arith.constant 0 : i32
    return %c0_i32, %c0_i32_0 : i32, i32
  }
  func.func @transform_3(%arg0: i32) -> (i32, i32) {
    %c0_i32 = arith.constant 0 : i32
    %c0_i32_0 = arith.constant 0 : i32
    %c0_i32_1 = arith.constant 0 : i32
    return %c0_i32, %c0_i32_0 : i32, i32
  }
  func.func @transform_4(%arg0: i32) -> (i32, i32) {
    %c0_i32 = arith.constant 0 : i32
    %c0_i32_0 = arith.constant 0 : i32
    %c0_i32_1 = arith.constant 0 : i32
    return %c0_i32, %c0_i32_0 : i32, i32
  }
  func.func @transform_5(%arg0: i32) -> (i32, i32) {
    %c0_i32 = arith.constant 0 : i32
    %c0_i32_0 = arith.constant 0 : i32
    %c0_i32_1 = arith.constant 0 : i32
    return %c0_i32, %c0_i32_0 : i32, i32
  }
  func.func @transform_6(%arg0: i32) -> (i32, i32) {
    %c0_i32 = arith.constant 0 : i32
    %c0_i32_0 = arith.constant 0 : i32
    %c0_i32_1 = arith.constant 0 : i32
    return %c0_i32, %c0_i32_0 : i32, i32
  }
  func.func @transform_7(%arg0: i32) -> (i32, i32) {
    %c0_i32 = arith.constant 0 : i32
    %c0_i32_0 = arith.constant 0 : i32
    %c0_i32_1 = arith.constant 0 : i32
    return %c0_i32, %c0_i32_0 : i32, i32
  }
  func.func @transform_8(%arg0: i32) -> (i32, i32) {
    %c0_i32 = arith.constant 0 : i32
    %c0_i32_0 = arith.constant 0 : i32
    %c0_i32_1 = arith.constant 0 : i32
    return %c0_i32, %c0_i32_0 : i32, i32
  }
  func.func @transform_9(%arg0: i32) -> (i32, i32) {
    %c0_i32 = arith.constant 0 : i32
    %c0_i32_0 = arith.constant 0 : i32
    return %c0_i32, %arg0 : i32, i32
  }
}

</mosaic_0001>

<llo_original>
// kernel: encoder_forward.1
$region0: #{encoder_forward.1}
  #allocation0 [shape = 'u32[]', space=smem, size = 0x4, offset = 0x4, fixed_abs, tag = 'smem constant byte address 0x4 - core index']
  #allocation1 [shape = 'u32[144,128]{1,0:T(1,128)}', space=vmem, size = 0x12000, scoped, tag = 'internal scratch']
  %s0 = inlined_call_operand.vmem [shape: f32[16,128], index: 0, kind: input, shape index: {}]
  %s1 = inlined_call_operand.vmem [shape: f32[8,128], index: 1, kind: input, shape index: {}]
  %s2 = inlined_call_operand.vmem [shape: f32[32,16], index: 2, kind: input, shape index: {}]
  %s3 = inlined_call_operand.vmem [shape: f32[32,8], index: 3, kind: input, shape index: {}]
  %s4 = inlined_call_operand.vmem [shape: f32[32,1], index: 4, kind: input, shape index: {}]
  %s5 = inlined_call_operand.vmem [shape: f32[32,32], index: 5, kind: input, shape index: {}]
  %s6 = inlined_call_operand.vmem [shape: f32[32,1], index: 6, kind: input, shape index: {}]
  %s7 = inlined_call_operand.vmem [shape: f32[16,32], index: 7, kind: input, shape index: {}]
  %s8 = inlined_call_operand.vmem [shape: f32[16,1], index: 8, kind: input, shape index: {}]
  %s9 = inlined_call_operand.vmem [shape: f32[16,128], index: 9, kind: output, shape index: {}]
  %s10 = sld [smem:[#allocation0]]
  $region46: #{encoder_forward.1} parent=0
    _
  %s12 = ssub.s32 1, %s10
  %s13 = scalar_select 0, %s12, %s10
  // Predicated region
  $region2: #{encoder_forward.1} parent=0 // pred_check
    _
  $region3: #{encoder_forward.1} parent=0 // pred_check_branch
    %15 = sbr.rel (0) target = $region5
  $region4: #{encoder_forward.1} parent=0 // pred_region
    _
  $region5: #{encoder_forward.1} parent=0 // pred_fallthru
    _
  // Predicated region
  $region6: #{encoder_forward.1} parent=0 // pred_check
    _
  $region7: #{encoder_forward.1} parent=0 // pred_check_branch
    %17 = sbr.rel (0) target = $region9
  $region8: #{encoder_forward.1} parent=0 // pred_region
    _
  $region9: #{encoder_forward.1} parent=0 // pred_fallthru
    _
  // Predicated region
  $region10: #{encoder_forward.1} parent=0 // pred_check
    _
  $region11: #{encoder_forward.1} parent=0 // pred_check_branch
    %19 = sbr.rel (0) target = $region13
  $region12: #{encoder_forward.1} parent=0 // pred_region
    _
  $region13: #{encoder_forward.1} parent=0 // pred_fallthru
    _
  // Predicated region
  $region14: #{encoder_forward.1} parent=0 // pred_check
    _
  $region15: #{encoder_forward.1} parent=0 // pred_check_branch
    %21 = sbr.rel (0) target = $region17
  $region16: #{encoder_forward.1} parent=0 // pred_region
    _
  $region17: #{encoder_forward.1} parent=0 // pred_fallthru
    _
  // Predicated region
  $region18: #{encoder_forward.1} parent=0 // pred_check
    _
  $region19: #{encoder_forward.1} parent=0 // pred_check_branch
    %23 = sbr.rel (0) target = $region21
  $region20: #{encoder_forward.1} parent=0 // pred_region
    _
  $region21: #{encoder_forward.1} parent=0 // pred_fallthru
    _
  // Predicated region
  $region22: #{encoder_forward.1} parent=0 // pred_check
    _
  $region23: #{encoder_forward.1} parent=0 // pred_check_branch
    %25 = sbr.rel (0) target = $region25
  $region24: #{encoder_forward.1} parent=0 // pred_region
    _
  $region25: #{encoder_forward.1} parent=0 // pred_fallthru
    _
  // Predicated region
  $region26: #{encoder_forward.1} parent=0 // pred_check
    _
  $region27: #{encoder_forward.1} parent=0 // pred_check_branch
    %27 = sbr.rel (0) target = $region29
  $region28: #{encoder_forward.1} parent=0 // pred_region
    _
  $region29: #{encoder_forward.1} parent=0 // pred_fallthru
    _
  // Predicated region
  $region30: #{encoder_forward.1} parent=0 // pred_check
    _
  $region31: #{encoder_forward.1} parent=0 // pred_check_branch
    %29 = sbr.rel (0) target = $region33
  $region32: #{encoder_forward.1} parent=0 // pred_region
    _
  $region33: #{encoder_forward.1} parent=0 // pred_fallthru
    _
  // Predicated region
  $region34: #{encoder_forward.1} parent=0 // pred_check
    _
  $region35: #{encoder_forward.1} parent=0 // pred_check_branch
    %31 = sbr.rel (0) target = $region37
  $region36: #{encoder_forward.1} parent=0 // pred_region
    _
  $region37: #{encoder_forward.1} parent=0 // pred_fallthru
    _
  %v32 = vld [vmem:[%s2] sm:$0xff]
  %v33 = vld [vmem:[%s2 + $0x8] sm:$0xff]
  %v34 = vld [vmem:[%s2 + $0x10] sm:$0xff]
  %v35 = vld [vmem:[%s2 + $0x18] sm:$0xff]
  %v36 = vld [vmem:[%s0] sm:$0xff]
  %v37 = vld [vmem:[%s0 + $0x8] sm:$0xff]
  %v38 = vld [vmem:[%s3] sm:$0xff]
  %v39 = vld [vmem:[%s3 + $0x8] sm:$0xff]
  %v40 = vld [vmem:[%s3 + $0x10] sm:$0xff]
  %v41 = vld [vmem:[%s3 + $0x18] sm:$0xff]
  %v42 = vld [vmem:[%s1] sm:$0xff]
  %vm43 = vcmask 64512
  %v45 = vsel %vm43, %v38, 0
  %v48 = vsel %vm43, %v39, 0
  %v51 = vsel %vm43, %v40, 0
  %v54 = vsel %vm43, %v41, 0
  %56 = vmatprep.subr.mxu0 0.0
  %57 = vmatpush1.msra.mxu0 %v42
  %58 = vmatprep.subr.mxu0 0.0
  %59 = vmatpush1.msra.mxu0 0.0
  %60 = vmatprep.subr.mxu0 0.0
  %61 = vmatpush1.msra.mxu0 0.0
  %62 = vmatprep.subr.mxu0 0.0
  %63 = vmatpush1.msra.mxu0 0.0
  %64 = vmatprep.subr.mxu0 0.0
  %65 = vmatpush1.msra.mxu0 0.0
  %66 = vmatprep.subr.mxu0 0.0
  %67 = vmatpush1.msra.mxu0 0.0
  %68 = vmatprep.subr.mxu0 0.0
  %69 = vmatpush1.msra.mxu0 0.0
  %70 = vmatprep.subr.mxu0 0.0
  %71 = vmatpush1.msra.mxu0 0.0
  %72 = vmatprep.subr.mxu0 0.0
  %73 = vmatpush1.msra.mxu0 0.0
  %74 = vmatprep.subr.mxu0 0.0
  %75 = vmatpush1.msra.mxu0 0.0
  %76 = vmatprep.subr.mxu0 0.0
  %77 = vmatpush1.msra.mxu0 0.0
  %78 = vmatprep.subr.mxu0 0.0
  %79 = vmatpush1.msra.mxu0 0.0
  %80 = vmatprep.subr.mxu0 0.0
  %81 = vmatpush1.msra.mxu0 0.0
  %82 = vmatprep.subr.mxu0 0.0
  %83 = vmatpush1.msra.mxu0 0.0
  %84 = vmatprep.subr.mxu0 0.0
  %85 = vmatpush1.msra.mxu0 0.0
  %86 = vmatprep.subr.mxu0 0.0
  %87 = vmatpush1.msra.mxu0 0.0
  %88 = vmatprep.subr.mxu0 0.0
  %89 = vmatpush1.msra.mxu0 0.0
  %90 = vmatprep.subr.mxu0 0.0
  %91 = vmatpush1.msra.mxu0 0.0
  %92 = vmatprep.subr.mxu0 0.0
  %93 = vmatpush1.msra.mxu0 0.0
  %94 = vmatprep.subr.mxu0 0.0
  %95 = vmatpush1.msra.mxu0 0.0
  %96 = vmatprep.subr.mxu0 0.0
  %97 = vmatpush1.msra.mxu0 0.0
  %98 = vmatprep.subr.mxu0 0.0
  %99 = vmatpush1.msra.mxu0 0.0
  %100 = vmatprep.subr.mxu0 0.0
  %101 = vmatpush1.msra.mxu0 0.0
  %102 = vmatprep.subr.mxu0 0.0
  %103 = vmatpush1.msra.mxu0 0.0
  %104 = vmatprep.subr.mxu0 0.0
  %105 = vmatpush1.msra.mxu0 0.0
  %106 = vmatprep.subr.mxu0 0.0
  %107 = vmatpush1.msra.mxu0 0.0
  %108 = vmatprep.subr.mxu0 0.0
  %109 = vmatpush1.msra.mxu0 0.0
  %110 = vmatprep.subr.mxu0 0.0
  %111 = vmatpush1.msra.mxu0 0.0
  %112 = vmatprep.subr.mxu0 0.0
  %113 = vmatpush1.msra.mxu0 0.0
  %114 = vmatprep.subr.mxu0 0.0
  %115 = vmatpush1.msra.mxu0 0.0
  %116 = vmatprep.subr.mxu0 0.0
  %117 = vmatpush1.msra.mxu0 0.0
  %118 = vmatprep.subr.mxu0 0.0
  %119 = vmatpush1.msra.mxu0 0.0
  %120 = vmatprep.mubr.f32.mxu0 0.0
  %121 = vmatmul.mubr.f32.gmra.mrb[0].mxu0 %v45
  %v122 = vpop.f32.mrb[0].mxu0
  %v123 = vadd.f32 0.0, %v122
  %v124 = vpop.f32.mrb[0].mxu0
  %125 = vmatprep.mubr.f32.mxu0 0.0
  %126 = vmatmul.mubr.f32.gmra.mrb[0].mxu0 %v48
  %v127 = vpop.f32.mrb[0].mxu0
  %v128 = vadd.f32 0.0, %v127
  %v129 = vpop.f32.mrb[0].mxu0
  %130 = vmatprep.mubr.f32.mxu0 0.0
  %131 = vmatmul.mubr.f32.gmra.mrb[0].mxu0 %v51
  %v132 = vpop.f32.mrb[0].mxu0
  %v133 = vadd.f32 0.0, %v132
  %v134 = vpop.f32.mrb[0].mxu0
  %135 = vmatprep.mubr.f32.mxu0 0.0
  %136 = vmatmul.mubr.f32.gmra.mrb[0].mxu0 %v54
  %v137 = vpop.f32.mrb[0].mxu0
  %v138 = vadd.f32 0.0, %v137
  %v139 = vpop.f32.mrb[0].mxu0
  %140 = vdwg.mxu0
  %vm141 = vcmask 130048
  %v143 = vsel %vm141, %v32, 0
  %v146 = vsel %vm141, %v33, 0
  %v149 = vsel %vm141, %v34, 0
  %v152 = vsel %vm141, %v35, 0
  %154 = vmatprep.subr.mxu0 0.0
  %155 = vmatpush1.msra.mxu0 %v36
  %156 = vmatprep.subr.mxu0 0.0
  %157 = vmatpush1.msra.mxu0 %v37
  %158 = vmatprep.subr.mxu0 0.0
  %159 = vmatpush1.msra.mxu0 0.0
  %160 = vmatprep.subr.mxu0 0.0
  %161 = vmatpush1.msra.mxu0 0.0
  %162 = vmatprep.subr.mxu0 0.0
  %163 = vmatpush1.msra.mxu0 0.0
  %164 = vmatprep.subr.mxu0 0.0
  %165 = vmatpush1.msra.mxu0 0.0
  %166 = vmatprep.subr.mxu0 0.0
  %167 = vmatpush1.msra.mxu0 0.0
  %168 = vmatprep.subr.mxu0 0.0
  %169 = vmatpush1.msra.mxu0 0.0
  %170 = vmatprep.subr.mxu0 0.0
  %171 = vmatpush1.msra.mxu0 0.0
  %172 = vmatprep.subr.mxu0 0.0
  %173 = vmatpush1.msra.mxu0 0.0
  %174 = vmatprep.subr.mxu0 0.0
  %175 = vmatpush1.msra.mxu0 0.0
  %176 = vmatprep.subr.mxu0 0.0
  %177 = vmatpush1.msra.mxu0 0.0
  %178 = vmatprep.subr.mxu0 0.0
  %179 = vmatpush1.msra.mxu0 0.0
  %180 = vmatprep.subr.mxu0 0.0
  %181 = vmatpush1.msra.mxu0 0.0
  %182 = vmatprep.subr.mxu0 0.0
  %183 = vmatpush1.msra.mxu0 0.0
  %184 = vmatprep.subr.mxu0 0.0
  %185 = vmatpush1.msra.mxu0 0.0
  %186 = vmatprep.subr.mxu0 0.0
  %187 = vmatpush1.msra.mxu0 0.0
  %188 = vmatprep.subr.mxu0 0.0
  %189 = vmatpush1.msra.mxu0 0.0
  %190 = vmatprep.subr.mxu0 0.0
  %191 = vmatpush1.msra.mxu0 0.0
  %192 = vmatprep.subr.mxu0 0.0
  %193 = vmatpush1.msra.mxu0 0.0
  %194 = vmatprep.subr.mxu0 0.0
  %195 = vmatpush1.msra.mxu0 0.0
  %196 = vmatprep.subr.mxu0 0.0
  %197 = vmatpush1.msra.mxu0 0.0
  %198 = vmatprep.subr.mxu0 0.0
  %199 = vmatpush1.msra.mxu0 0.0
  %200 = vmatprep.subr.mxu0 0.0
  %201 = vmatpush1.msra.mxu0 0.0
  %202 = vmatprep.subr.mxu0 0.0
  %203 = vmatpush1.msra.mxu0 0.0
  %204 = vmatprep.subr.mxu0 0.0
  %205 = vmatpush1.msra.mxu0 0.0
  %206 = vmatprep.subr.mxu0 0.0
  %207 = vmatpush1.msra.mxu0 0.0
  %208 = vmatprep.subr.mxu0 0.0
  %209 = vmatpush1.msra.mxu0 0.0
  %210 = vmatprep.subr.mxu0 0.0
  %211 = vmatpush1.msra.mxu0 0.0
  %212 = vmatprep.subr.mxu0 0.0
  %213 = vmatpush1.msra.mxu0 0.0
  %214 = vmatprep.subr.mxu0 0.0
  %215 = vmatpush1.msra.mxu0 0.0
  %216 = vmatprep.subr.mxu0 0.0
  %217 = vmatpush1.msra.mxu0 0.0
  %218 = vmatprep.mubr.f32.mxu0 0.0
  %219 = vmatmul.mubr.f32.gmra.mrb[0].mxu0 %v143
  %v220 = vpop.f32.mrb[0].mxu0
  %v221 = vadd.f32 %v123, %v220
  %v222 = vpop.f32.mrb[0].mxu0
  %223 = vmatprep.mubr.f32.mxu0 0.0
  %224 = vmatmul.mubr.f32.gmra.mrb[0].mxu0 %v146
  %v225 = vpop.f32.mrb[0].mxu0
  %v226 = vadd.f32 %v128, %v225
  %v227 = vpop.f32.mrb[0].mxu0
  %228 = vmatprep.mubr.f32.mxu0 0.0
  %229 = vmatmul.mubr.f32.gmra.mrb[0].mxu0 %v149
  %v230 = vpop.f32.mrb[0].mxu0
  %v231 = vadd.f32 %v133, %v230
  %v232 = vpop.f32.mrb[0].mxu0
  %233 = vmatprep.mubr.f32.mxu0 0.0
  %234 = vmatmul.mubr.f32.gmra.mrb[0].mxu0 %v152
  %v235 = vpop.f32.mrb[0].mxu0
  %v236 = vadd.f32 %v138, %v235
  %v237 = vpop.f32.mrb[0].mxu0
  %238 = vdwg.mxu0
  %v239 = vld [vmem:[%s4] sm:$0xff]
  %v240 = vld [vmem:[%s4 + $0x8] sm:$0xff]
  %v241 = vld [vmem:[%s4 + $0x10] sm:$0xff]
  %v242 = vld [vmem:[%s4 + $0x18] sm:$0xff]
  %244 = vset.pattern.permute.xlu0 0
  %245 = vperm.xlu0 %244, %v239
  %v246 = vpop.permute.xlu0 %245
  %249 = vset.pattern.permute.xlu0 0
  %250 = vperm.xlu0 %249, %v240
  %v251 = vpop.permute.xlu0 %250
  %254 = vset.pattern.permute.xlu0 0
  %255 = vperm.xlu0 %254, %v241
  %v256 = vpop.permute.xlu0 %255
  %259 = vset.pattern.permute.xlu0 0
  %260 = vperm.xlu0 %259, %v242
  %v261 = vpop.permute.xlu0 %260
  %v263 = vadd.f32 %v221, %v246
  %v264 = vadd.f32 %v226, %v251
  %v265 = vadd.f32 %v231, %v256
  %v266 = vadd.f32 %v236, %v261
  %vm267 = vcmp.gt.f32.partialorder %v263, 0.0
  %vm268 = vcmp.gt.f32.partialorder %v264, 0.0
  %vm269 = vcmp.gt.f32.partialorder %v265, 0.0
  %vm270 = vcmp.gt.f32.partialorder %v266, 0.0
  %v271 = vmul.f32 %v263, 0.2
  %v272 = vmul.f32 %v264, 0.2
  %v273 = vmul.f32 %v265, 0.2
  %v274 = vmul.f32 %v266, 0.2
  %v275 = vsel %vm267, %v263, %v271
  %v276 = vsel %vm268, %v264, %v272
  %v277 = vsel %vm269, %v265, %v273
  %v278 = vsel %vm270, %v266, %v274
  %v279 = vld [vmem:[%s5] sm:$0xff]
  %v280 = vld [vmem:[%s5 + $0x8] sm:$0xff]
  %v281 = vld [vmem:[%s5 + $0x10] sm:$0xff]
  %v282 = vld [vmem:[%s5 + $0x18] sm:$0xff]
  %v283 = vld [vmem:[%s6] sm:$0xff]
  %v284 = vld [vmem:[%s6 + $0x8] sm:$0xff]
  %v285 = vld [vmem:[%s6 + $0x10] sm:$0xff]
  %v286 = vld [vmem:[%s6 + $0x18] sm:$0xff]
  %288 = vset.pattern.permute.xlu0 0
  %289 = vperm.xlu0 %288, %v283
  %v290 = vpop.permute.xlu0 %289
  %293 = vset.pattern.permute.xlu0 0
  %294 = vperm.xlu0 %293, %v284
  %v295 = vpop.permute.xlu0 %294
  %298 = vset.pattern.permute.xlu0 0
  %299 = vperm.xlu0 %298, %v285
  %v300 = vpop.permute.xlu0 %299
  %303 = vset.pattern.permute.xlu0 0
  %304 = vperm.xlu0 %303, %v286
  %v305 = vpop.permute.xlu0 %304
  %vm307 = vcmask 261120
  %v309 = vsel %vm307, %v279, 0
  %v312 = vsel %vm307, %v280, 0
  %v315 = vsel %vm307, %v281, 0
  %v318 = vsel %vm307, %v282, 0
  %320 = vmatprep.subr.mxu0 0.0
  %321 = vmatpush1.msra.mxu0 %v275
  %322 = vmatprep.subr.mxu0 0.0
  %323 = vmatpush1.msra.mxu0 %v276
  %324 = vmatprep.subr.mxu0 0.0
  %325 = vmatpush1.msra.mxu0 %v277
  %326 = vmatprep.subr.mxu0 0.0
  %327 = vmatpush1.msra.mxu0 %v278
  %328 = vmatprep.subr.mxu0 0.0
  %329 = vmatpush1.msra.mxu0 0.0
  %330 = vmatprep.subr.mxu0 0.0
  %331 = vmatpush1.msra.mxu0 0.0
  %332 = vmatprep.subr.mxu0 0.0
  %333 = vmatpush1.msra.mxu0 0.0
  %334 = vmatprep.subr.mxu0 0.0
  %335 = vmatpush1.msra.mxu0 0.0
  %336 = vmatprep.subr.mxu0 0.0
  %337 = vmatpush1.msra.mxu0 0.0
  %338 = vmatprep.subr.mxu0 0.0
  %339 = vmatpush1.msra.mxu0 0.0
  %340 = vmatprep.subr.mxu0 0.0
  %341 = vmatpush1.msra.mxu0 0.0
  %342 = vmatprep.subr.mxu0 0.0
  %343 = vmatpush1.msra.mxu0 0.0
  %344 = vmatprep.subr.mxu0 0.0
  %345 = vmatpush1.msra.mxu0 0.0
  %346 = vmatprep.subr.mxu0 0.0
  %347 = vmatpush1.msra.mxu0 0.0
  %348 = vmatprep.subr.mxu0 0.0
  %349 = vmatpush1.msra.mxu0 0.0
  %350 = vmatprep.subr.mxu0 0.0
  %351 = vmatpush1.msra.mxu0 0.0
  %352 = vmatprep.subr.mxu0 0.0
  %353 = vmatpush1.msra.mxu0 0.0
  %354 = vmatprep.subr.mxu0 0.0
  %355 = vmatpush1.msra.mxu0 0.0
  %356 = vmatprep.subr.mxu0 0.0
  %357 = vmatpush1.msra.mxu0 0.0
  %358 = vmatprep.subr.mxu0 0.0
  %359 = vmatpush1.msra.mxu0 0.0
  %360 = vmatprep.subr.mxu0 0.0
  %361 = vmatpush1.msra.mxu0 0.0
  %362 = vmatprep.subr.mxu0 0.0
  %363 = vmatpush1.msra.mxu0 0.0
  %364 = vmatprep.subr.mxu0 0.0
  %365 = vmatpush1.msra.mxu0 0.0
  %366 = vmatprep.subr.mxu0 0.0
  %367 = vmatpush1.msra.mxu0 0.0
  %368 = vmatprep.subr.mxu0 0.0
  %369 = vmatpush1.msra.mxu0 0.0
  %370 = vmatprep.subr.mxu0 0.0
  %371 = vmatpush1.msra.mxu0 0.0
  %372 = vmatprep.subr.mxu0 0.0
  %373 = vmatpush1.msra.mxu0 0.0
  %374 = vmatprep.subr.mxu0 0.0
  %375 = vmatpush1.msra.mxu0 0.0
  %376 = vmatprep.subr.mxu0 0.0
  %377 = vmatpush1.msra.mxu0 0.0
  %378 = vmatprep.subr.mxu0 0.0
  %379 = vmatpush1.msra.mxu0 0.0
  %380 = vmatprep.subr.mxu0 0.0
  %381 = vmatpush1.msra.mxu0 0.0
  %382 = vmatprep.subr.mxu0 0.0
  %383 = vmatpush1.msra.mxu0 0.0
  %384 = vmatprep.mubr.f32.mxu0 0.0
  %385 = vmatmul.mubr.f32.gmra.mrb[0].mxu0 %v309
  %v386 = vpop.f32.mrb[0].mxu0
  %v387 = vadd.f32 %v290, %v386
  %v388 = vpop.f32.mrb[0].mxu0
  %389 = vmatprep.mubr.f32.mxu0 0.0
  %390 = vmatmul.mubr.f32.gmra.mrb[0].mxu0 %v312
  %v391 = vpop.f32.mrb[0].mxu0
  %v392 = vadd.f32 %v295, %v391
  %v393 = vpop.f32.mrb[0].mxu0
  %394 = vmatprep.mubr.f32.mxu0 0.0
  %395 = vmatmul.mubr.f32.gmra.mrb[0].mxu0 %v315
  %v396 = vpop.f32.mrb[0].mxu0
  %v397 = vadd.f32 %v300, %v396
  %v398 = vpop.f32.mrb[0].mxu0
  %399 = vmatprep.mubr.f32.mxu0 0.0
  %400 = vmatmul.mubr.f32.gmra.mrb[0].mxu0 %v318
  %v401 = vpop.f32.mrb[0].mxu0
  %v402 = vadd.f32 %v305, %v401
  %v403 = vpop.f32.mrb[0].mxu0
  %404 = vdwg.mxu0
  %vm405 = vcmp.gt.f32.partialorder %v387, 0.0
  %vm406 = vcmp.gt.f32.partialorder %v392, 0.0
  %vm407 = vcmp.gt.f32.partialorder %v397, 0.0
  %vm408 = vcmp.gt.f32.partialorder %v402, 0.0
  %v409 = vmul.f32 %v387, 0.2
  %v410 = vmul.f32 %v392, 0.2
  %v411 = vmul.f32 %v397, 0.2
  %v412 = vmul.f32 %v402, 0.2
  %v413 = vsel %vm405, %v387, %v409
  %v414 = vsel %vm406, %v392, %v410
  %v415 = vsel %vm407, %v397, %v411
  %v416 = vsel %vm408, %v402, %v412
  %v417 = vld [vmem:[%s7] sm:$0xff]
  %v418 = vld [vmem:[%s7 + $0x8] sm:$0xff]
  %v419 = vld [vmem:[%s8] sm:$0xff]
  %v420 = vld [vmem:[%s8 + $0x8] sm:$0xff]
  %422 = vset.pattern.permute.xlu0 0
  %423 = vperm.xlu0 %422, %v419
  %v424 = vpop.permute.xlu0 %423
  %427 = vset.pattern.permute.xlu0 0
  %428 = vperm.xlu0 %427, %v420
  %v429 = vpop.permute.xlu0 %428
  %v432 = vsel %vm307, %v417, 0
  %v435 = vsel %vm307, %v418, 0
  %437 = vmatprep.subr.mxu0 0.0
  %438 = vmatpush1.msra.mxu0 %v413
  %439 = vmatprep.subr.mxu0 0.0
  %440 = vmatpush1.msra.mxu0 %v414
  %441 = vmatprep.subr.mxu0 0.0
  %442 = vmatpush1.msra.mxu0 %v415
  %443 = vmatprep.subr.mxu0 0.0
  %444 = vmatpush1.msra.mxu0 %v416
  %445 = vmatprep.subr.mxu0 0.0
  %446 = vmatpush1.msra.mxu0 0.0
  %447 = vmatprep.subr.mxu0 0.0
  %448 = vmatpush1.msra.mxu0 0.0
  %449 = vmatprep.subr.mxu0 0.0
  %450 = vmatpush1.msra.mxu0 0.0
  %451 = vmatprep.subr.mxu0 0.0
  %452 = vmatpush1.msra.mxu0 0.0
  %453 = vmatprep.subr.mxu0 0.0
  %454 = vmatpush1.msra.mxu0 0.0
  %455 = vmatprep.subr.mxu0 0.0
  %456 = vmatpush1.msra.mxu0 0.0
  %457 = vmatprep.subr.mxu0 0.0
  %458 = vmatpush1.msra.mxu0 0.0
  %459 = vmatprep.subr.mxu0 0.0
  %460 = vmatpush1.msra.mxu0 0.0
  %461 = vmatprep.subr.mxu0 0.0
  %462 = vmatpush1.msra.mxu0 0.0
  %463 = vmatprep.subr.mxu0 0.0
  %464 = vmatpush1.msra.mxu0 0.0
  %465 = vmatprep.subr.mxu0 0.0
  %466 = vmatpush1.msra.mxu0 0.0
  %467 = vmatprep.subr.mxu0 0.0
  %468 = vmatpush1.msra.mxu0 0.0
  %469 = vmatprep.subr.mxu0 0.0
  %470 = vmatpush1.msra.mxu0 0.0
  %471 = vmatprep.subr.mxu0 0.0
  %472 = vmatpush1.msra.mxu0 0.0
  %473 = vmatprep.subr.mxu0 0.0
  %474 = vmatpush1.msra.mxu0 0.0
  %475 = vmatprep.subr.mxu0 0.0
  %476 = vmatpush1.msra.mxu0 0.0
  %477 = vmatprep.subr.mxu0 0.0
  %478 = vmatpush1.msra.mxu0 0.0
  %479 = vmatprep.subr.mxu0 0.0
  %480 = vmatpush1.msra.mxu0 0.0
  %481 = vmatprep.subr.mxu0 0.0
  %482 = vmatpush1.msra.mxu0 0.0
  %483 = vmatprep.subr.mxu0 0.0
  %484 = vmatpush1.msra.mxu0 0.0
  %485 = vmatprep.subr.mxu0 0.0
  %486 = vmatpush1.msra.mxu0 0.0
  %487 = vmatprep.subr.mxu0 0.0
  %488 = vmatpush1.msra.mxu0 0.0
  %489 = vmatprep.subr.mxu0 0.0
  %490 = vmatpush1.msra.mxu0 0.0
  %491 = vmatprep.subr.mxu0 0.0
  %492 = vmatpush1.msra.mxu0 0.0
  %493 = vmatprep.subr.mxu0 0.0
  %494 = vmatpush1.msra.mxu0 0.0
  %495 = vmatprep.subr.mxu0 0.0
  %496 = vmatpush1.msra.mxu0 0.0
  %497 = vmatprep.subr.mxu0 0.0
  %498 = vmatpush1.msra.mxu0 0.0
  %499 = vmatprep.subr.mxu0 0.0
  %500 = vmatpush1.msra.mxu0 0.0
  %501 = vmatprep.mubr.f32.mxu0 0.0
  %502 = vmatmul.mubr.f32.gmra.mrb[0].mxu0 %v432
  %v503 = vpop.f32.mrb[0].mxu0
  %v504 = vadd.f32 %v424, %v503
  %v505 = vpop.f32.mrb[0].mxu0
  %506 = vmatprep.mubr.f32.mxu0 0.0
  %507 = vmatmul.mubr.f32.gmra.mrb[0].mxu0 %v435
  %v508 = vpop.f32.mrb[0].mxu0
  %v509 = vadd.f32 %v429, %v508
  %v510 = vpop.f32.mrb[0].mxu0
  %511 = vdwg.mxu0
  %512 = vst [vmem:[%s9] sm:$0xff] %v504
  %513 = vst [vmem:[%s9 + $0x8] sm:$0xff] %v509
  // Predicated region
  $region38: #{encoder_forward.1} parent=0 // pred_check
    _
  $region39: #{encoder_forward.1} parent=0 // pred_check_branch
    %515 = sbr.rel (0) target = $region41
  $region40: #{encoder_forward.1} parent=0 // pred_region
    _
  $region41: #{encoder_forward.1} parent=0 // pred_fallthru
    _
  // Predicated region
  $region42: #{encoder_forward.1} parent=0 // pred_check
    _
  $region43: #{encoder_forward.1} parent=0 // pred_check_branch
    %517 = sbr.rel (0) target = $region45
  $region44: #{encoder_forward.1} parent=0 // pred_region
    _
  $region45: #{encoder_forward.1} parent=0 // pred_fallthru
    _

</llo_original>
